<compile_context>
chip_gen: v7x
topology: tpu7x:2x2x1
jax: 0.10.0
libtpu: 0.0.40
codegen_flags: <defaults>
</compile_context>

<pallas_src>
import jax
import jax.numpy as jnp
from jax.experimental import pallas as pl
from jax.experimental.pallas import tpu as pltpu

FEAT = 2048  # hard-coded in nViewNet (2048-dim base features)


def _pick_bv_tile(bv, cap=64):
    """Tile for the B*V axis: full axis if small, else a multiple-of-8 divisor."""
    if bv <= cap:
        return bv
    for t in range(cap, 0, -8):
        if t % 8 == 0 and bv % t == 0:
            return t
    return bv  # fallback: whole axis (always layout-legal)


# --------------------------------------------------------------------------
# Kernel 1: synthetic base model (per-view feature extractor)
#   pooled_sum = sum_{H*W}(img)                  (tbv, C)   [1/HW folded in Wb]
#   feat       = relu(pooled_sum @ Wb' + bb)     (tbv, 2048)
# --------------------------------------------------------------------------
def base_kernel(img_ref, wb_ref, bb_ref, o_ref):
    x = img_ref[...].astype(jnp.float32)            # cast in VMEM (free VPU work)
    pooled = jnp.sum(x, axis=-1)                    # (tbv, C)  lane-axis reduce
    feat = jnp.dot(pooled, wb_ref[...], preferred_element_type=jnp.float32)
    o_ref[...] = jnp.maximum(feat + bb_ref[...], 0.0)


def base_forward(images_flat, wb, bb):
    BV, C, HW = images_flat.shape
    tbv = _pick_bv_tile(BV)
    # Fold the 1/(H*W) mean scale into the weight (mathematically identical).
    wb_scaled = (wb * (1.0 / HW)).astype(jnp.float32)
    return pl.pallas_call(
        base_kernel,
        out_shape=jax.ShapeDtypeStruct((BV, FEAT), jnp.float32),
        grid=(BV // tbv,),
        in_specs=[
            pl.BlockSpec((tbv, C, HW), lambda i: (i, 0, 0)),
            pl.BlockSpec((C, FEAT), lambda i: (0, 0)),
            pl.BlockSpec((1, FEAT), lambda i: (0, 0)),
        ],
        out_specs=pl.BlockSpec((tbv, FEAT), lambda i: (i, 0)),
        compiler_params=pltpu.CompilerParams(
            dimension_semantics=("parallel",),
            vmem_limit_bytes=32 * 1024 * 1024),
    )(images_flat, wb_scaled, bb)


# --------------------------------------------------------------------------
# Kernel 2: fused nViewNet head
#   h   = relu(x @ W1 + b1)    (collapse: Linear(2048*V -> 2048) + ReLU)
#   out = h @ W2 + b2          (fc:       Linear(2048 -> num_classes))
# Grid = (N-tiles ["parallel"], K-tiles ["arbitrary"]).  For each N tile the
# collapse accumulates over K into an f32 VMEM scratch; on the last K step the
# ReLU + fc matmul produce a lane-dense (B, 128-padded) partial-logit block.
# Partial logits from the N tiles are summed (and b2 added) in the wrapper.
# --------------------------------------------------------------------------
def head_kernel(x_ref, w1_ref, b1_ref, w2_ref, o_ref, acc_ref):
    k = pl.program_id(1)

    @pl.when(k == 0)
    def _():
        acc_ref[...] = jnp.zeros_like(acc_ref)

    acc_ref[...] += jnp.dot(x_ref[...].astype(jnp.bfloat16), w1_ref[...],
                            preferred_element_type=jnp.float32)

    @pl.when(k == pl.num_programs(1) - 1)
    def _():
        h = jnp.maximum(acc_ref[...] + b1_ref[...], 0.0)          # collapse
        o_ref[0, :, :] = jnp.dot(h.astype(jnp.bfloat16), w2_ref[...],
                                 preferred_element_type=jnp.float32)  # fc (partial)


def head_forward(x, w1, b1, w2, b2, *, tk=2048, tn=1024):
    B, K = x.shape
    _, N = w1.shape
    _, NC = w2.shape
    tk = min(tk, K)
    tn = min(tn, N)
    assert K % tk == 0 and N % tn == 0
    n_tiles, k_tiles = N // tn, K // tk

    # Stream the big weights as bf16 (halves HBM traffic); f32 accumulation on MXU.
    w1_bf = w1.astype(jnp.bfloat16)
    # Lane-dense fc output: pad class dim up to a multiple of 128.
    NCP = ((NC + 127) // 128) * 128
    w2_bf = jnp.pad(w2.astype(jnp.bfloat16), ((0, 0), (0, NCP - NC)))

    partial = pl.pallas_call(
        head_kernel,
        out_shape=jax.ShapeDtypeStruct((n_tiles, B, NCP), jnp.float32),
        grid=(n_tiles, k_tiles),
        in_specs=[
            pl.BlockSpec((B, tk), lambda n, k: (0, k)),
            pl.BlockSpec((tk, tn), lambda n, k: (k, n)),
            pl.BlockSpec((1, tn), lambda n, k: (0, n)),
            pl.BlockSpec((tn, NCP), lambda n, k: (n, 0)),
        ],
        out_specs=pl.BlockSpec((1, B, NCP), lambda n, k: (n, 0, 0)),
        scratch_shapes=[pltpu.VMEM((B, tn), jnp.float32)],
        compiler_params=pltpu.CompilerParams(
            dimension_semantics=("parallel", "arbitrary"),
            vmem_limit_bytes=32 * 1024 * 1024),
    )(x, w1_bf, b1, w2_bf)

    # Sum the per-N-tile partial logits, slice off lane padding, add fc bias.
    return partial.sum(axis=0)[:, :NC] + b2


# --------------------------------------------------------------------------
# Full nViewNet forward (glue in plain JAX: reshapes / view concatenation)
# --------------------------------------------------------------------------
def nviewnet_forward(image_series, wb, bb, w1, b1, w2, b2):
    B, V, C, H, W = image_series.shape
    # per-view base features (loop over views in torch == batched here);
    # NOTE: no wrapper-side .astype(f32) — the cast happens inside the kernel.
    imgs = image_series.reshape(B * V, C, H * W)
    feats = base_forward(imgs, wb, bb)                 # (B*V, 2048) f32
    # torch.cat([...], dim=1) over views == reshape (B, V*2048)
    feats_nviews = feats.reshape(B, V * FEAT)
    return head_forward(feats_nviews, w1, b1, w2, b2)  # (B, num_classes)


# --------------------------------------------------------------------------
# Reference mirroring the kernel numerics (bf16 weight streaming, f32 accum)
# --------------------------------------------------------------------------
def _reference(image_series, wb, bb, w1, b1, w2, b2):
    B, V, C, H, W = image_series.shape
    pooled = jnp.mean(image_series.astype(jnp.float32), axis=(-2, -1))  # (B,V,C)
    feats = jnp.maximum(pooled @ wb + bb, 0.0)                          # (B,V,2048)
    x = feats.reshape(B, V * FEAT)
    bf = jnp.bfloat16
    h = jnp.maximum(
        jnp.dot(x.astype(bf), w1.astype(bf),
                preferred_element_type=jnp.float32) + b1, 0.0)
    return jnp.dot(h.astype(bf), w2.astype(bf),
                   preferred_element_type=jnp.float32) + b2


if __name__ == "__main__":
    B, V, C, H, W = 2, 2, 4, 16, 16
    num_classes = 8

    key = jax.random.PRNGKey(0)
    k1, k2, k3, k4, k5, k6, k7 = jax.random.split(key, 7)
    image_series = jax.random.normal(k1, (B, V, C, H, W), jnp.float32)

    # deterministic synthetic parameters
    wb = jax.random.normal(k2, (C, FEAT), jnp.float32) / jnp.sqrt(C)
    bb = jax.random.normal(k3, (1, FEAT), jnp.float32) * 0.01
    w1 = jax.random.normal(k4, (FEAT * V, FEAT), jnp.float32) / jnp.sqrt(FEAT * V)
    b1 = jax.random.normal(k5, (1, FEAT), jnp.float32) * 0.01
    w2 = jax.random.normal(k6, (FEAT, num_classes), jnp.float32) / jnp.sqrt(FEAT)
    b2 = jax.random.normal(k7, (1, num_classes), jnp.float32) * 0.01

    out = nviewnet_forward(image_series, wb, bb, w1, b1, w2, b2)
    jax.block_until_ready(out)

    assert out.shape == (B, num_classes), out.shape
    ref = _reference(image_series, wb, bb, w1, b1, w2, b2)
    assert jnp.allclose(out, ref, atol=2e-3, rtol=2e-3), "mismatch vs reference"

    print("KERNEL_OK")
</pallas_src>

<mosaic_0001>
module attributes {stable_mosaic.version = 11 : i64} {
  func.func @base_kernel(%arg0: i32, %arg1: memref<4x4x256xf32, #tpu.memory_space<vmem>>, %arg2: memref<4x2048xf32, #tpu.memory_space<vmem>>, %arg3: memref<1x2048xf32, #tpu.memory_space<vmem>>, %arg4: memref<4x2048xf32, #tpu.memory_space<vmem>>) attributes {dimension_semantics = [#tpu.dimension_semantics<parallel>], iteration_bounds = array<i64: 1>, scalar_prefetch = 0 : i64, scratch_operands = 0 : i64, tpu.core_type = #tpu.core_type<tc>, window_params = [{transform_indices = @transform_0, window_bounds = array<i64: 4, 4, 256>}, {pipeline_mode = #tpu.pipeline_mode<synchronous>, transform_indices = @transform_1, window_bounds = array<i64: 4, 2048>}, {pipeline_mode = #tpu.pipeline_mode<synchronous>, transform_indices = @transform_2, window_bounds = array<i64: 1, 2048>}, {transform_indices = @transform_3, window_bounds = array<i64: 4, 2048>}]} {
    %c0 = arith.constant 0 : index
    %c0_0 = arith.constant 0 : index
    %c0_1 = arith.constant 0 : index
    %0 = vector.load %arg1[%c0, %c0_0, %c0_1] : memref<4x4x256xf32, #tpu.memory_space<vmem>>, vector<4x4x256xf32>
    %cst = arith.constant dense<0.000000e+00> : vector<4x4xf32>
    %1 = vector.multi_reduction <add>, %0, %cst [2] : vector<4x4x256xf32> to vector<4x4xf32>
    %c0_2 = arith.constant 0 : index
    %c0_3 = arith.constant 0 : index
    %2 = vector.load %arg2[%c0_2, %c0_3] : memref<4x2048xf32, #tpu.memory_space<vmem>>, vector<4x2048xf32>
    %cst_4 = arith.constant dense<0.000000e+00> : vector<4x2048xf32>
    %3 = tpu.matmul %1, %2, %cst_4 {dimension_numbers = #tpu.dot_dimension_numbers<[1], [0], [0], [1], [0, 0, 1, 1], [], []>} : vector<4x4xf32>, vector<4x2048xf32>, vector<4x2048xf32> -> vector<4x2048xf32>
    %c0_5 = arith.constant 0 : index
    %c0_6 = arith.constant 0 : index
    %4 = vector.load %arg3[%c0_5, %c0_6] : memref<1x2048xf32, #tpu.memory_space<vmem>>, vector<1x2048xf32>
    %5 = vector.broadcast %4 : vector<1x2048xf32> to vector<4x2048xf32>
    %6 = arith.addf %3, %5 : vector<4x2048xf32>
    %cst_7 = arith.constant 0.000000e+00 : f32
    %7 = vector.broadcast %cst_7 : f32 to vector<4x2048xf32>
    %8 = arith.maximumf %6, %7 : vector<4x2048xf32>
    %c0_8 = arith.constant 0 : index
    %c0_9 = arith.constant 0 : index
    %9 = vector.load %arg4[%c0_8, %c0_9] : memref<4x2048xf32, #tpu.memory_space<vmem>>, vector<4x2048xf32>
    tpu.vector_store %arg4[%c0_8, %c0_9], %8 {strides = array<i32>} : memref<4x2048xf32, #tpu.memory_space<vmem>>, vector<4x2048xf32>,
    return
  }
  func.func @transform_0(%arg0: i32) -> (i32, i32, i32) {
    %c0_i32 = arith.constant 0 : i32
    %c0_i32_0 = arith.constant 0 : i32
    %c0_i32_1 = arith.constant 0 : i32
    return %arg0, %c0_i32, %c0_i32_0 : i32, i32, i32
  }
  func.func @transform_1(%arg0: i32) -> (i32, i32) {
    %c0_i32 = arith.constant 0 : i32
    %c0_i32_0 = arith.constant 0 : i32
    %c0_i32_1 = arith.constant 0 : i32
    return %c0_i32, %c0_i32_0 : i32, i32
  }
  func.func @transform_2(%arg0: i32) -> (i32, i32) {
    %c0_i32 = arith.constant 0 : i32
    %c0_i32_0 = arith.constant 0 : i32
    %c0_i32_1 = arith.constant 0 : i32
    return %c0_i32, %c0_i32_0 : i32, i32
  }
  func.func @transform_3(%arg0: i32) -> (i32, i32) {
    %c0_i32 = arith.constant 0 : i32
    %c0_i32_0 = arith.constant 0 : i32
    return %arg0, %c0_i32 : i32, i32
  }
}

</mosaic_0001>

<llo_original>
// kernel: tpu_custom_call.1
$region0: #{tpu_custom_call.1}
  #allocation0 [shape = 'u32[]', space=smem, size = 0x4, offset = 0x4, fixed_abs, tag = 'smem constant byte address 0x4 - core index']
  #allocation1 [shape = 'u32[144,128]{1,0:T(1,128)}', space=vmem, size = 0x12000, scoped, tag = 'internal scratch']
  %s0 = inlined_call_operand.hbm [shape: f32[4,4,256], index: 0, kind: input, shape index: {}]
  %s1 = inlined_call_operand.hbm [shape: f32[4,2048], index: 1, kind: input, shape index: {}]
  %s2 = inlined_call_operand.hbm [shape: f32[1,2048], index: 2, kind: input, shape index: {}]
  %s3 = inlined_call_operand.hbm [shape: f32[4,2048], index: 3, kind: output, shape index: {}]
  %s4 = sld [smem:[#allocation0]]
  $region34: #{tpu_custom_call.1} parent=0
    _
  %s6 = ssub.s32 1, %s4
  %s7 = scalar_select 0, %s6, %s4
  $region1: #{tpu_custom_call.1} parent=0
    #allocation2 [shape = 'u8[16384]{0}', space=vmem, size = 0x4000, scoped, tag = 'input window, operand 0, single buffered']
    #allocation3 [shape = 's32[1]{0}', space=sflag, size = 0x4, scoped, tag = 'scoped memory for tpu_custom_call.1']
    #allocation4 [shape = 's32[1]{0}', space=sflag, size = 0x4, scoped, tag = 'scoped memory for tpu_custom_call.1']
    #allocation5 [shape = 'u8[32768]{0}', space=vmem, size = 0x8000, scoped, tag = 'input window, operand 1, single buffered']
    #allocation6 [shape = 's32[1]{0}', space=sflag, size = 0x4, scoped, tag = 'scoped memory for tpu_custom_call.1']
    #allocation7 [shape = 'u8[8192]{0}', space=vmem, size = 0x2000, scoped, tag = 'input window, operand 2, single buffered']
    #allocation8 [shape = 'u8[32768]{0}', space=vmem, size = 0x8000, scoped, tag = 'output window, operand 0, single buffered']
    %8 = vsyncpa [#allocation3], 0
    %9 = vsyncpa [#allocation6], 0
    %10 = vsyncpa [#allocation4], 0
    // Predicated region
    $region2: #{tpu_custom_call.1} parent=1 // pred_check
      _
    $region3: #{tpu_custom_call.1} parent=1 // pred_check_branch
      %12 = sbr.rel (0) target = $region5
    $region4: #{tpu_custom_call.1} parent=1 // pred_region
      %s14 = ssub.s32 512, 512
      %15 = vsyncadd [#allocation3], %s14
      %s16 = sshll.u32 [#allocation2], 4
      %s17 = int_to_ptr.vmem [resolvable:$true] %s16
      %22 = dma.hbm_to_vmem [thread:$0]  %s0, 512, %s17, [#allocation3], 128, 128, 8
    $region5: #{tpu_custom_call.1} parent=1 // pred_fallthru
      _
    // Predicated region
    $region6: #{tpu_custom_call.1} parent=1 // pred_check
      _
    $region7: #{tpu_custom_call.1} parent=1 // pred_check_branch
      %24 = sbr.rel (0) target = $region9
    $region8: #{tpu_custom_call.1} parent=1 // pred_region
      %s26 = ssub.s32 1024, 1024
      %27 = vsyncadd [#allocation6], %s26
      %s29 = sshll.u32 [#allocation5], 4
      %s30 = int_to_ptr.vmem [resolvable:$true] %s29
      %32 = dma.hbm_to_vmem [thread:$0]  %s1, 1024, %s30, [#allocation6]
    $region9: #{tpu_custom_call.1} parent=1 // pred_fallthru
      _
    // Predicated region
    $region10: #{tpu_custom_call.1} parent=1 // pred_check
      _
    $region11: #{tpu_custom_call.1} parent=1 // pred_check_branch
      %34 = sbr.rel (0) target = $region13
    $region12: #{tpu_custom_call.1} parent=1 // pred_region
      %s36 = ssub.s32 256, 256
      %37 = vsyncadd [#allocation6], %s36
      %s39 = sshll.u32 [#allocation7], 4
      %s40 = int_to_ptr.vmem [resolvable:$true] %s39
      %42 = dma.hbm_to_vmem [thread:$0]  %s2, 256, %s40, [#allocation6]
    $region13: #{tpu_custom_call.1} parent=1 // pred_fallthru
      _
    // Predicated region
    $region14: #{tpu_custom_call.1} parent=1 // pred_check
      _
    $region15: #{tpu_custom_call.1} parent=1 // pred_check_branch
      %44 = sbr.rel (0) target = $region17
    $region16: #{tpu_custom_call.1} parent=1 // pred_region
      %45 = dma.done [#allocation3], 512
    $region17: #{tpu_custom_call.1} parent=1 // pred_fallthru
      _
    // Predicated region
    $region18: #{tpu_custom_call.1} parent=1 // pred_check
      _
    $region19: #{tpu_custom_call.1} parent=1 // pred_check_branch
      %47 = sbr.rel (0) target = $region21
    $region20: #{tpu_custom_call.1} parent=1 // pred_region
      %48 = dma.done [#allocation6], 1024
    $region21: #{tpu_custom_call.1} parent=1 // pred_fallthru
      _
    // Predicated region
    $region22: #{tpu_custom_call.1} parent=1 // pred_check
      _
    $region23: #{tpu_custom_call.1} parent=1 // pred_check_branch
      %50 = sbr.rel (0) target = $region25
    $region24: #{tpu_custom_call.1} parent=1 // pred_region
      %51 = dma.done [#allocation6], 256
    $region25: #{tpu_custom_call.1} parent=1 // pred_fallthru
      _
    %v52 = vld [vmem:[#allocation2] sm:$0xff]
    %v53 = vld [vmem:[#allocation2 + $0x8] sm:$0xff]
    %v54 = vld [vmem:[#allocation2 + $0x10] sm:$0xff]
    %v55 = vld [vmem:[#allocation2 + $0x18] sm:$0xff]
    %v60 = vcombine.high %v52, %v52
    %v61 = vcombine.high %v53, %v53
    %v62 = vcombine.high %v54, %v54
    %v63 = vcombine.high %v55, %v55
    %vm68 = vcmask 1043456
    %v69 = vsel %vm68, %v52, 0.0
    %v70 = vsel %vm68, %v60, 0.0
    %v71 = vadd.f32 %v69, %v70
    %72 = vadd.xlane.f32.xlu0 %v71
    %v73 = vpop.xlane.xlu0 %72
    %v74 = vsel %vm68, %v53, 0.0
    %v75 = vsel %vm68, %v61, 0.0
    %v76 = vadd.f32 %v74, %v75
    %77 = vadd.xlane.f32.xlu0 %v76
    %v78 = vpop.xlane.xlu0 %77
    %v79 = vsel %vm68, %v54, 0.0
    %v80 = vsel %vm68, %v62, 0.0
    %v81 = vadd.f32 %v79, %v80
    %82 = vadd.xlane.f32.xlu0 %v81
    %v83 = vpop.xlane.xlu0 %82
    %v84 = vsel %vm68, %v55, 0.0
    %v85 = vsel %vm68, %v63, 0.0
    %v86 = vadd.f32 %v84, %v85
    %87 = vadd.xlane.f32.xlu0 %v86
    %v88 = vpop.xlane.xlu0 %87
    %v89 = vld [vmem:[#allocation5] sm:$0xff]
    %v90 = vld [vmem:[#allocation5 + $0x8] sm:$0xff]
    %v91 = vld [vmem:[#allocation5 + $0x10] sm:$0xff]
    %v92 = vld [vmem:[#allocation5 + $0x18] sm:$0xff]
    %v93 = vld [vmem:[#allocation5 + $0x20] sm:$0xff]
    %v94 = vld [vmem:[#allocation5 + $0x28] sm:$0xff]
    %v95 = vld [vmem:[#allocation5 + $0x30] sm:$0xff]
    %v96 = vld [vmem:[#allocation5 + $0x38] sm:$0xff]
    %v97 = vld [vmem:[#allocation7] sm:$0xff]
    %v98 = vld [vmem:[#allocation7 + $0x8] sm:$0xff]
    %v101 = vlaneseq
    %v102 = vshrl.u32 %v101, 7
    %v103 = vsub.s32 0, %v102
    %v104 = vrot.slane %v97, %v103
    %v105 = vlaneseq
    %v106 = vshrl.u32 %v105, 7
    %v107 = vsub.s32 1, %v106
    %v108 = vrot.slane %v97, %v107
    %v109 = vlaneseq
    %v110 = vshrl.u32 %v109, 7
    %v111 = vsub.s32 2, %v110
    %v112 = vrot.slane %v97, %v111
    %v113 = vlaneseq
    %v114 = vshrl.u32 %v113, 7
    %v115 = vsub.s32 3, %v114
    %v116 = vrot.slane %v97, %v115
    %v117 = vlaneseq
    %v118 = vshrl.u32 %v117, 7
    %v119 = vsub.s32 4, %v118
    %v120 = vrot.slane %v97, %v119
    %v121 = vlaneseq
    %v122 = vshrl.u32 %v121, 7
    %v123 = vsub.s32 5, %v122
    %v124 = vrot.slane %v97, %v123
    %v125 = vlaneseq
    %v126 = vshrl.u32 %v125, 7
    %v127 = vsub.s32 6, %v126
    %v128 = vrot.slane %v97, %v127
    %v129 = vlaneseq
    %v130 = vshrl.u32 %v129, 7
    %v131 = vsub.s32 7, %v130
    %v132 = vrot.slane %v97, %v131
    %v133 = vlaneseq
    %v134 = vshrl.u32 %v133, 7
    %v135 = vsub.s32 0, %v134
    %v136 = vrot.slane %v98, %v135
    %v137 = vlaneseq
    %v138 = vshrl.u32 %v137, 7
    %v139 = vsub.s32 1, %v138
    %v140 = vrot.slane %v98, %v139
    %v141 = vlaneseq
    %v142 = vshrl.u32 %v141, 7
    %v143 = vsub.s32 2, %v142
    %v144 = vrot.slane %v98, %v143
    %v145 = vlaneseq
    %v146 = vshrl.u32 %v145, 7
    %v147 = vsub.s32 3, %v146
    %v148 = vrot.slane %v98, %v147
    %v149 = vlaneseq
    %v150 = vshrl.u32 %v149, 7
    %v151 = vsub.s32 4, %v150
    %v152 = vrot.slane %v98, %v151
    %v153 = vlaneseq
    %v154 = vshrl.u32 %v153, 7
    %v155 = vsub.s32 5, %v154
    %v156 = vrot.slane %v98, %v155
    %v157 = vlaneseq
    %v158 = vshrl.u32 %v157, 7
    %v159 = vsub.s32 6, %v158
    %v160 = vrot.slane %v98, %v159
    %v161 = vlaneseq
    %v162 = vshrl.u32 %v161, 7
    %v163 = vsub.s32 7, %v162
    %v164 = vrot.slane %v98, %v163
    %v185 = vlaneseq
    %v186 = vand.u32 %v185, 127
    %v187 = vlaneseq
    %v188 = vshrl.u32 %v187, 7
    %v189 = vsub.s32 %v186, %v188
    %v190 = vrot.slane %v73, %v189
    %v191 = vlaneseq
    %v192 = vshrl.u32 %v191, 7
    %v193 = vsub.s32 %v186, %v192
    %v194 = vrot.slane %v78, %v193
    %v195 = vlaneseq
    %v196 = vshrl.u32 %v195, 7
    %v197 = vsub.s32 %v186, %v196
    %v198 = vrot.slane %v83, %v197
    %v199 = vlaneseq
    %v200 = vshrl.u32 %v199, 7
    %v201 = vsub.s32 %v186, %v200
    %v202 = vrot.slane %v88, %v201
    %vm203 = vcmask 1041409
    %v204 = vsel %vm203, %v194, %v190
    %vm205 = vcmask 1042434
    %v206 = vsel %vm205, %v198, %v204
    %vm207 = vcmask 1043459
    %v208 = vsel %vm207, %v202, %v206
    %v217 = vcombine.high %v89, %v89
    %v218 = vcombine.high %v90, %v90
    %v219 = vcombine.high %v91, %v91
    %v220 = vcombine.high %v92, %v92
    %v221 = vcombine.high %v93, %v93
    %v222 = vcombine.high %v94, %v94
    %v223 = vcombine.high %v95, %v95
    %v224 = vcombine.high %v96, %v96
    %vm225 = vcmask 31744
    %v226 = vsel %vm225, %v208, 0
    %v228 = vsel %vm68, %v89, 0
    %v230 = vsel %vm68, %v217, 0
    %v232 = vsel %vm68, %v90, 0
    %v234 = vsel %vm68, %v218, 0
    %v236 = vsel %vm68, %v91, 0
    %v238 = vsel %vm68, %v219, 0
    %v240 = vsel %vm68, %v92, 0
    %v242 = vsel %vm68, %v220, 0
    %v244 = vsel %vm68, %v93, 0
    %v246 = vsel %vm68, %v221, 0
    %v248 = vsel %vm68, %v94, 0
    %v250 = vsel %vm68, %v222, 0
    %v252 = vsel %vm68, %v95, 0
    %v254 = vsel %vm68, %v223, 0
    %v256 = vsel %vm68, %v96, 0
    %v258 = vsel %vm68, %v224, 0
    %260 = vmatprep.subr.mxu0 %v230
    %261 = vmatpush1.msra.mxu0 %v228
    %262 = vmatprep.subr.mxu0 0.0
    %263 = vmatpush1.msra.mxu0 0.0
    %264 = vmatprep.subr.mxu0 0.0
    %265 = vmatpush1.msra.mxu0 0.0
    %266 = vmatprep.subr.mxu0 0.0
    %267 = vmatpush1.msra.mxu0 0.0
    %268 = vmatprep.subr.mxu0 0.0
    %269 = vmatpush1.msra.mxu0 0.0
    %270 = vmatprep.subr.mxu0 0.0
    %271 = vmatpush1.msra.mxu0 0.0
    %272 = vmatprep.subr.mxu0 0.0
    %273 = vmatpush1.msra.mxu0 0.0
    %274 = vmatprep.subr.mxu0 0.0
    %275 = vmatpush1.msra.mxu0 0.0
    %276 = vmatprep.subr.mxu0 0.0
    %277 = vmatpush1.msra.mxu0 0.0
    %278 = vmatprep.subr.mxu0 0.0
    %279 = vmatpush1.msra.mxu0 0.0
    %280 = vmatprep.subr.mxu0 0.0
    %281 = vmatpush1.msra.mxu0 0.0
    %282 = vmatprep.subr.mxu0 0.0
    %283 = vmatpush1.msra.mxu0 0.0
    %284 = vmatprep.subr.mxu0 0.0
    %285 = vmatpush1.msra.mxu0 0.0
    %286 = vmatprep.subr.mxu0 0.0
    %287 = vmatpush1.msra.mxu0 0.0
    %288 = vmatprep.subr.mxu0 0.0
    %289 = vmatpush1.msra.mxu0 0.0
    %290 = vmatprep.subr.mxu0 0.0
    %291 = vmatpush1.msra.mxu0 0.0
    %292 = vmatprep.subr.mxu0 0.0
    %293 = vmatpush1.msra.mxu0 0.0
    %294 = vmatprep.subr.mxu0 0.0
    %295 = vmatpush1.msra.mxu0 0.0
    %296 = vmatprep.subr.mxu0 0.0
    %297 = vmatpush1.msra.mxu0 0.0
    %298 = vmatprep.subr.mxu0 0.0
    %299 = vmatpush1.msra.mxu0 0.0
    %300 = vmatprep.subr.mxu0 0.0
    %301 = vmatpush1.msra.mxu0 0.0
    %302 = vmatprep.subr.mxu0 0.0
    %303 = vmatpush1.msra.mxu0 0.0
    %304 = vmatprep.subr.mxu0 0.0
    %305 = vmatpush1.msra.mxu0 0.0
    %306 = vmatprep.subr.mxu0 0.0
    %307 = vmatpush1.msra.mxu0 0.0
    %308 = vmatprep.subr.mxu0 0.0
    %309 = vmatpush1.msra.mxu0 0.0
    %310 = vmatprep.subr.mxu0 0.0
    %311 = vmatpush1.msra.mxu0 0.0
    %312 = vmatprep.subr.mxu0 0.0
    %313 = vmatpush1.msra.mxu0 0.0
    %314 = vmatprep.subr.mxu0 0.0
    %315 = vmatpush1.msra.mxu0 0.0
    %316 = vmatprep.subr.mxu0 0.0
    %317 = vmatpush1.msra.mxu0 0.0
    %318 = vmatprep.subr.mxu0 0.0
    %319 = vmatpush1.msra.mxu0 0.0
    %320 = vmatprep.subr.mxu0 0.0
    %321 = vmatpush1.msra.mxu0 0.0
    %322 = vmatprep.subr.mxu0 0.0
    %323 = vmatpush1.msra.mxu0 0.0
    %324 = vmatprep.mubr.f32.mxu0 0.0
    %325 = vmatmul.mubr.f32.gmra.mrb[0].mxu0 %v226
    %v326 = vpop.f32.mrb[0].mxu0
    %v327 = vadd.f32 %v104, %v326
    %v328 = vpop.f32.mrb[0].mxu0
    %v329 = vadd.f32 %v108, %v328
    %330 = vdwg.mxu0
    %331 = vmatprep.subr.mxu0 %v234
    %332 = vmatpush1.msra.mxu0 %v232
    %333 = vmatprep.subr.mxu0 0.0
    %334 = vmatpush1.msra.mxu0 0.0
    %335 = vmatprep.subr.mxu0 0.0
    %336 = vmatpush1.msra.mxu0 0.0
    %337 = vmatprep.subr.mxu0 0.0
    %338 = vmatpush1.msra.mxu0 0.0
    %339 = vmatprep.subr.mxu0 0.0
    %340 = vmatpush1.msra.mxu0 0.0
    %341 = vmatprep.subr.mxu0 0.0
    %342 = vmatpush1.msra.mxu0 0.0
    %343 = vmatprep.subr.mxu0 0.0
    %344 = vmatpush1.msra.mxu0 0.0
    %345 = vmatprep.subr.mxu0 0.0
    %346 = vmatpush1.msra.mxu0 0.0
    %347 = vmatprep.subr.mxu0 0.0
    %348 = vmatpush1.msra.mxu0 0.0
    %349 = vmatprep.subr.mxu0 0.0
    %350 = vmatpush1.msra.mxu0 0.0
    %351 = vmatprep.subr.mxu0 0.0
    %352 = vmatpush1.msra.mxu0 0.0
    %353 = vmatprep.subr.mxu0 0.0
    %354 = vmatpush1.msra.mxu0 0.0
    %355 = vmatprep.subr.mxu0 0.0
    %356 = vmatpush1.msra.mxu0 0.0
    %357 = vmatprep.subr.mxu0 0.0
    %358 = vmatpush1.msra.mxu0 0.0
    %359 = vmatprep.subr.mxu0 0.0
    %360 = vmatpush1.msra.mxu0 0.0
    %361 = vmatprep.subr.mxu0 0.0
    %362 = vmatpush1.msra.mxu0 0.0
    %363 = vmatprep.subr.mxu0 0.0
    %364 = vmatpush1.msra.mxu0 0.0
    %365 = vmatprep.subr.mxu0 0.0
    %366 = vmatpush1.msra.mxu0 0.0
    %367 = vmatprep.subr.mxu0 0.0
    %368 = vmatpush1.msra.mxu0 0.0
    %369 = vmatprep.subr.mxu0 0.0
    %370 = vmatpush1.msra.mxu0 0.0
    %371 = vmatprep.subr.mxu0 0.0
    %372 = vmatpush1.msra.mxu0 0.0
    %373 = vmatprep.subr.mxu0 0.0
    %374 = vmatpush1.msra.mxu0 0.0
    %375 = vmatprep.subr.mxu0 0.0
    %376 = vmatpush1.msra.mxu0 0.0
    %377 = vmatprep.subr.mxu0 0.0
    %378 = vmatpush1.msra.mxu0 0.0
    %379 = vmatprep.subr.mxu0 0.0
    %380 = vmatpush1.msra.mxu0 0.0
    %381 = vmatprep.subr.mxu0 0.0
    %382 = vmatpush1.msra.mxu0 0.0
    %383 = vmatprep.subr.mxu0 0.0
    %384 = vmatpush1.msra.mxu0 0.0
    %385 = vmatprep.subr.mxu0 0.0
    %386 = vmatpush1.msra.mxu0 0.0
    %387 = vmatprep.subr.mxu0 0.0
    %388 = vmatpush1.msra.mxu0 0.0
    %389 = vmatprep.subr.mxu0 0.0
    %390 = vmatpush1.msra.mxu0 0.0
    %391 = vmatprep.subr.mxu0 0.0
    %392 = vmatpush1.msra.mxu0 0.0
    %393 = vmatprep.subr.mxu0 0.0
    %394 = vmatpush1.msra.mxu0 0.0
    %395 = vmatprep.mubr.f32.mxu0 0.0
    %396 = vmatmul.mubr.f32.gmra.mrb[0].mxu0 %v226
    %v397 = vpop.f32.mrb[0].mxu0
    %v398 = vadd.f32 %v112, %v397
    %v399 = vpop.f32.mrb[0].mxu0
    %v400 = vadd.f32 %v116, %v399
    %401 = vdwg.mxu0
    %402 = vmatprep.subr.mxu0 %v238
    %403 = vmatpush1.msra.mxu0 %v236
    %404 = vmatprep.subr.mxu0 0.0
    %405 = vmatpush1.msra.mxu0 0.0
    %406 = vmatprep.subr.mxu0 0.0
    %407 = vmatpush1.msra.mxu0 0.0
    %408 = vmatprep.subr.mxu0 0.0
    %409 = vmatpush1.msra.mxu0 0.0
    %410 = vmatprep.subr.mxu0 0.0
    %411 = vmatpush1.msra.mxu0 0.0
    %412 = vmatprep.subr.mxu0 0.0
    %413 = vmatpush1.msra.mxu0 0.0
    %414 = vmatprep.subr.mxu0 0.0
    %415 = vmatpush1.msra.mxu0 0.0
    %416 = vmatprep.subr.mxu0 0.0
    %417 = vmatpush1.msra.mxu0 0.0
    %418 = vmatprep.subr.mxu0 0.0
    %419 = vmatpush1.msra.mxu0 0.0
    %420 = vmatprep.subr.mxu0 0.0
    %421 = vmatpush1.msra.mxu0 0.0
    %422 = vmatprep.subr.mxu0 0.0
    %423 = vmatpush1.msra.mxu0 0.0
    %424 = vmatprep.subr.mxu0 0.0
    %425 = vmatpush1.msra.mxu0 0.0
    %426 = vmatprep.subr.mxu0 0.0
    %427 = vmatpush1.msra.mxu0 0.0
    %428 = vmatprep.subr.mxu0 0.0
    %429 = vmatpush1.msra.mxu0 0.0
    %430 = vmatprep.subr.mxu0 0.0
    %431 = vmatpush1.msra.mxu0 0.0
    %432 = vmatprep.subr.mxu0 0.0
    %433 = vmatpush1.msra.mxu0 0.0
    %434 = vmatprep.subr.mxu0 0.0
    %435 = vmatpush1.msra.mxu0 0.0
    %436 = vmatprep.subr.mxu0 0.0
    %437 = vmatpush1.msra.mxu0 0.0
    %438 = vmatprep.subr.mxu0 0.0
    %439 = vmatpush1.msra.mxu0 0.0
    %440 = vmatprep.subr.mxu0 0.0
    %441 = vmatpush1.msra.mxu0 0.0
    %442 = vmatprep.subr.mxu0 0.0
    %443 = vmatpush1.msra.mxu0 0.0
    %444 = vmatprep.subr.mxu0 0.0
    %445 = vmatpush1.msra.mxu0 0.0
    %446 = vmatprep.subr.mxu0 0.0
    %447 = vmatpush1.msra.mxu0 0.0
    %448 = vmatprep.subr.mxu0 0.0
    %449 = vmatpush1.msra.mxu0 0.0
    %450 = vmatprep.subr.mxu0 0.0
    %451 = vmatpush1.msra.mxu0 0.0
    %452 = vmatprep.subr.mxu0 0.0
    %453 = vmatpush1.msra.mxu0 0.0
    %454 = vmatprep.subr.mxu0 0.0
    %455 = vmatpush1.msra.mxu0 0.0
    %456 = vmatprep.subr.mxu0 0.0
    %457 = vmatpush1.msra.mxu0 0.0
    %458 = vmatprep.subr.mxu0 0.0
    %459 = vmatpush1.msra.mxu0 0.0
    %460 = vmatprep.subr.mxu0 0.0
    %461 = vmatpush1.msra.mxu0 0.0
    %462 = vmatprep.subr.mxu0 0.0
    %463 = vmatpush1.msra.mxu0 0.0
    %464 = vmatprep.subr.mxu0 0.0
    %465 = vmatpush1.msra.mxu0 0.0
    %466 = vmatprep.mubr.f32.mxu0 0.0
    %467 = vmatmul.mubr.f32.gmra.mrb[0].mxu0 %v226
    %v468 = vpop.f32.mrb[0].mxu0
    %v469 = vadd.f32 %v120, %v468
    %v470 = vpop.f32.mrb[0].mxu0
    %v471 = vadd.f32 %v124, %v470
    %472 = vdwg.mxu0
    %473 = vmatprep.subr.mxu0 %v242
    %474 = vmatpush1.msra.mxu0 %v240
    %475 = vmatprep.subr.mxu0 0.0
    %476 = vmatpush1.msra.mxu0 0.0
    %477 = vmatprep.subr.mxu0 0.0
    %478 = vmatpush1.msra.mxu0 0.0
    %479 = vmatprep.subr.mxu0 0.0
    %480 = vmatpush1.msra.mxu0 0.0
    %481 = vmatprep.subr.mxu0 0.0
    %482 = vmatpush1.msra.mxu0 0.0
    %483 = vmatprep.subr.mxu0 0.0
    %484 = vmatpush1.msra.mxu0 0.0
    %485 = vmatprep.subr.mxu0 0.0
    %486 = vmatpush1.msra.mxu0 0.0
    %487 = vmatprep.subr.mxu0 0.0
    %488 = vmatpush1.msra.mxu0 0.0
    %489 = vmatprep.subr.mxu0 0.0
    %490 = vmatpush1.msra.mxu0 0.0
    %491 = vmatprep.subr.mxu0 0.0
    %492 = vmatpush1.msra.mxu0 0.0
    %493 = vmatprep.subr.mxu0 0.0
    %494 = vmatpush1.msra.mxu0 0.0
    %495 = vmatprep.subr.mxu0 0.0
    %496 = vmatpush1.msra.mxu0 0.0
    %497 = vmatprep.subr.mxu0 0.0
    %498 = vmatpush1.msra.mxu0 0.0
    %499 = vmatprep.subr.mxu0 0.0
    %500 = vmatpush1.msra.mxu0 0.0
    %501 = vmatprep.subr.mxu0 0.0
    %502 = vmatpush1.msra.mxu0 0.0
    %503 = vmatprep.subr.mxu0 0.0
    %504 = vmatpush1.msra.mxu0 0.0
    %505 = vmatprep.subr.mxu0 0.0
    %506 = vmatpush1.msra.mxu0 0.0
    %507 = vmatprep.subr.mxu0 0.0
    %508 = vmatpush1.msra.mxu0 0.0
    %509 = vmatprep.subr.mxu0 0.0
    %510 = vmatpush1.msra.mxu0 0.0
    %511 = vmatprep.subr.mxu0 0.0
    %512 = vmatpush1.msra.mxu0 0.0
    %513 = vmatprep.subr.mxu0 0.0
    %514 = vmatpush1.msra.mxu0 0.0
    %515 = vmatprep.subr.mxu0 0.0
    %516 = vmatpush1.msra.mxu0 0.0
    %517 = vmatprep.subr.mxu0 0.0
    %518 = vmatpush1.msra.mxu0 0.0
    %519 = vmatprep.subr.mxu0 0.0
    %520 = vmatpush1.msra.mxu0 0.0
    %521 = vmatprep.subr.mxu0 0.0
    %522 = vmatpush1.msra.mxu0 0.0
    %523 = vmatprep.subr.mxu0 0.0
    %524 = vmatpush1.msra.mxu0 0.0
    %525 = vmatprep.subr.mxu0 0.0
    %526 = vmatpush1.msra.mxu0 0.0
    %527 = vmatprep.subr.mxu0 0.0
    %528 = vmatpush1.msra.mxu0 0.0
    %529 = vmatprep.subr.mxu0 0.0
    %530 = vmatpush1.msra.mxu0 0.0
    %531 = vmatprep.subr.mxu0 0.0
    %532 = vmatpush1.msra.mxu0 0.0
    %533 = vmatprep.subr.mxu0 0.0
    %534 = vmatpush1.msra.mxu0 0.0
    %535 = vmatprep.subr.mxu0 0.0
    %536 = vmatpush1.msra.mxu0 0.0
    %537 = vmatprep.mubr.f32.mxu0 0.0
    %538 = vmatmul.mubr.f32.gmra.mrb[0].mxu0 %v226
    %v539 = vpop.f32.mrb[0].mxu0
    %v540 = vadd.f32 %v128, %v539
    %v541 = vpop.f32.mrb[0].mxu0
    %v542 = vadd.f32 %v132, %v541
    %543 = vdwg.mxu0
    %544 = vmatprep.subr.mxu0 %v246
    %545 = vmatpush1.msra.mxu0 %v244
    %546 = vmatprep.subr.mxu0 0.0
    %547 = vmatpush1.msra.mxu0 0.0
    %548 = vmatprep.subr.mxu0 0.0
    %549 = vmatpush1.msra.mxu0 0.0
    %550 = vmatprep.subr.mxu0 0.0
    %551 = vmatpush1.msra.mxu0 0.0
    %552 = vmatprep.subr.mxu0 0.0
    %553 = vmatpush1.msra.mxu0 0.0
    %554 = vmatprep.subr.mxu0 0.0
    %555 = vmatpush1.msra.mxu0 0.0
    %556 = vmatprep.subr.mxu0 0.0
    %557 = vmatpush1.msra.mxu0 0.0
    %558 = vmatprep.subr.mxu0 0.0
    %559 = vmatpush1.msra.mxu0 0.0
    %560 = vmatprep.subr.mxu0 0.0
    %561 = vmatpush1.msra.mxu0 0.0
    %562 = vmatprep.subr.mxu0 0.0
    %563 = vmatpush1.msra.mxu0 0.0
    %564 = vmatprep.subr.mxu0 0.0
    %565 = vmatpush1.msra.mxu0 0.0
    %566 = vmatprep.subr.mxu0 0.0
    %567 = vmatpush1.msra.mxu0 0.0
    %568 = vmatprep.subr.mxu0 0.0
    %569 = vmatpush1.msra.mxu0 0.0
    %570 = vmatprep.subr.mxu0 0.0
    %571 = vmatpush1.msra.mxu0 0.0
    %572 = vmatprep.subr.mxu0 0.0
    %573 = vmatpush1.msra.mxu0 0.0
    %574 = vmatprep.subr.mxu0 0.0
    %575 = vmatpush1.msra.mxu0 0.0
    %576 = vmatprep.subr.mxu0 0.0
    %577 = vmatpush1.msra.mxu0 0.0
    %578 = vmatprep.subr.mxu0 0.0
    %579 = vmatpush1.msra.mxu0 0.0
    %580 = vmatprep.subr.mxu0 0.0
    %581 = vmatpush1.msra.mxu0 0.0
    %582 = vmatprep.subr.mxu0 0.0
    %583 = vmatpush1.msra.mxu0 0.0
    %584 = vmatprep.subr.mxu0 0.0
    %585 = vmatpush1.msra.mxu0 0.0
    %586 = vmatprep.subr.mxu0 0.0
    %587 = vmatpush1.msra.mxu0 0.0
    %588 = vmatprep.subr.mxu0 0.0
    %589 = vmatpush1.msra.mxu0 0.0
    %590 = vmatprep.subr.mxu0 0.0
    %591 = vmatpush1.msra.mxu0 0.0
    %592 = vmatprep.subr.mxu0 0.0
    %593 = vmatpush1.msra.mxu0 0.0
    %594 = vmatprep.subr.mxu0 0.0
    %595 = vmatpush1.msra.mxu0 0.0
    %596 = vmatprep.subr.mxu0 0.0
    %597 = vmatpush1.msra.mxu0 0.0
    %598 = vmatprep.subr.mxu0 0.0
    %599 = vmatpush1.msra.mxu0 0.0
    %600 = vmatprep.subr.mxu0 0.0
    %601 = vmatpush1.msra.mxu0 0.0
    %602 = vmatprep.subr.mxu0 0.0
    %603 = vmatpush1.msra.mxu0 0.0
    %604 = vmatprep.subr.mxu0 0.0
    %605 = vmatpush1.msra.mxu0 0.0
    %606 = vmatprep.subr.mxu0 0.0
    %607 = vmatpush1.msra.mxu0 0.0
    %608 = vmatprep.mubr.f32.mxu0 0.0
    %609 = vmatmul.mubr.f32.gmra.mrb[0].mxu0 %v226
    %v610 = vpop.f32.mrb[0].mxu0
    %v611 = vadd.f32 %v136, %v610
    %v612 = vpop.f32.mrb[0].mxu0
    %v613 = vadd.f32 %v140, %v612
    %614 = vdwg.mxu0
    %615 = vmatprep.subr.mxu0 %v250
    %616 = vmatpush1.msra.mxu0 %v248
    %617 = vmatprep.subr.mxu0 0.0
    %618 = vmatpush1.msra.mxu0 0.0
    %619 = vmatprep.subr.mxu0 0.0
    %620 = vmatpush1.msra.mxu0 0.0
    %621 = vmatprep.subr.mxu0 0.0
    %622 = vmatpush1.msra.mxu0 0.0
    %623 = vmatprep.subr.mxu0 0.0
    %624 = vmatpush1.msra.mxu0 0.0
    %625 = vmatprep.subr.mxu0 0.0
    %626 = vmatpush1.msra.mxu0 0.0
    %627 = vmatprep.subr.mxu0 0.0
    %628 = vmatpush1.msra.mxu0 0.0
    %629 = vmatprep.subr.mxu0 0.0
    %630 = vmatpush1.msra.mxu0 0.0
    %631 = vmatprep.subr.mxu0 0.0
    %632 = vmatpush1.msra.mxu0 0.0
    %633 = vmatprep.subr.mxu0 0.0
    %634 = vmatpush1.msra.mxu0 0.0
    %635 = vmatprep.subr.mxu0 0.0
    %636 = vmatpush1.msra.mxu0 0.0
    %637 = vmatprep.subr.mxu0 0.0
    %638 = vmatpush1.msra.mxu0 0.0
    %639 = vmatprep.subr.mxu0 0.0
    %640 = vmatpush1.msra.mxu0 0.0
    %641 = vmatprep.subr.mxu0 0.0
    %642 = vmatpush1.msra.mxu0 0.0
    %643 = vmatprep.subr.mxu0 0.0
    %644 = vmatpush1.msra.mxu0 0.0
    %645 = vmatprep.subr.mxu0 0.0
    %646 = vmatpush1.msra.mxu0 0.0
    %647 = vmatprep.subr.mxu0 0.0
    %648 = vmatpush1.msra.mxu0 0.0
    %649 = vmatprep.subr.mxu0 0.0
    %650 = vmatpush1.msra.mxu0 0.0
    %651 = vmatprep.subr.mxu0 0.0
    %652 = vmatpush1.msra.mxu0 0.0
    %653 = vmatprep.subr.mxu0 0.0
    %654 = vmatpush1.msra.mxu0 0.0
    %655 = vmatprep.subr.mxu0 0.0
    %656 = vmatpush1.msra.mxu0 0.0
    %657 = vmatprep.subr.mxu0 0.0
    %658 = vmatpush1.msra.mxu0 0.0
    %659 = vmatprep.subr.mxu0 0.0
    %660 = vmatpush1.msra.mxu0 0.0
    %661 = vmatprep.subr.mxu0 0.0
    %662 = vmatpush1.msra.mxu0 0.0
    %663 = vmatprep.subr.mxu0 0.0
    %664 = vmatpush1.msra.mxu0 0.0
    %665 = vmatprep.subr.mxu0 0.0
    %666 = vmatpush1.msra.mxu0 0.0
    %667 = vmatprep.subr.mxu0 0.0
    %668 = vmatpush1.msra.mxu0 0.0
    %669 = vmatprep.subr.mxu0 0.0
    %670 = vmatpush1.msra.mxu0 0.0
    %671 = vmatprep.subr.mxu0 0.0
    %672 = vmatpush1.msra.mxu0 0.0
    %673 = vmatprep.subr.mxu0 0.0
    %674 = vmatpush1.msra.mxu0 0.0
    %675 = vmatprep.subr.mxu0 0.0
    %676 = vmatpush1.msra.mxu0 0.0
    %677 = vmatprep.subr.mxu0 0.0
    %678 = vmatpush1.msra.mxu0 0.0
    %679 = vmatprep.mubr.f32.mxu0 0.0
    %680 = vmatmul.mubr.f32.gmra.mrb[0].mxu0 %v226
    %v681 = vpop.f32.mrb[0].mxu0
    %v682 = vadd.f32 %v144, %v681
    %v683 = vpop.f32.mrb[0].mxu0
    %v684 = vadd.f32 %v148, %v683
    %685 = vdwg.mxu0
    %686 = vmatprep.subr.mxu0 %v254
    %687 = vmatpush1.msra.mxu0 %v252
    %688 = vmatprep.subr.mxu0 0.0
    %689 = vmatpush1.msra.mxu0 0.0
    %690 = vmatprep.subr.mxu0 0.0
    %691 = vmatpush1.msra.mxu0 0.0
    %692 = vmatprep.subr.mxu0 0.0
    %693 = vmatpush1.msra.mxu0 0.0
    %694 = vmatprep.subr.mxu0 0.0
    %695 = vmatpush1.msra.mxu0 0.0
    %696 = vmatprep.subr.mxu0 0.0
    %697 = vmatpush1.msra.mxu0 0.0
    %698 = vmatprep.subr.mxu0 0.0
    %699 = vmatpush1.msra.mxu0 0.0
    %700 = vmatprep.subr.mxu0 0.0
    %701 = vmatpush1.msra.mxu0 0.0
    %702 = vmatprep.subr.mxu0 0.0
    %703 = vmatpush1.msra.mxu0 0.0
    %704 = vmatprep.subr.mxu0 0.0
    %705 = vmatpush1.msra.mxu0 0.0
    %706 = vmatprep.subr.mxu0 0.0
    %707 = vmatpush1.msra.mxu0 0.0
    %708 = vmatprep.subr.mxu0 0.0
    %709 = vmatpush1.msra.mxu0 0.0
    %710 = vmatprep.subr.mxu0 0.0
    %711 = vmatpush1.msra.mxu0 0.0
    %712 = vmatprep.subr.mxu0 0.0
    %713 = vmatpush1.msra.mxu0 0.0
    %714 = vmatprep.subr.mxu0 0.0
    %715 = vmatpush1.msra.mxu0 0.0
    %716 = vmatprep.subr.mxu0 0.0
    %717 = vmatpush1.msra.mxu0 0.0
    %718 = vmatprep.subr.mxu0 0.0
    %719 = vmatpush1.msra.mxu0 0.0
    %720 = vmatprep.subr.mxu0 0.0
    %721 = vmatpush1.msra.mxu0 0.0
    %722 = vmatprep.subr.mxu0 0.0
    %723 = vmatpush1.msra.mxu0 0.0
    %724 = vmatprep.subr.mxu0 0.0
    %725 = vmatpush1.msra.mxu0 0.0
    %726 = vmatprep.subr.mxu0 0.0
    %727 = vmatpush1.msra.mxu0 0.0
    %728 = vmatprep.subr.mxu0 0.0
    %729 = vmatpush1.msra.mxu0 0.0
    %730 = vmatprep.subr.mxu0 0.0
    %731 = vmatpush1.msra.mxu0 0.0
    %732 = vmatprep.subr.mxu0 0.0
    %733 = vmatpush1.msra.mxu0 0.0
    %734 = vmatprep.subr.mxu0 0.0
    %735 = vmatpush1.msra.mxu0 0.0
    %736 = vmatprep.subr.mxu0 0.0
    %737 = vmatpush1.msra.mxu0 0.0
    %738 = vmatprep.subr.mxu0 0.0
    %739 = vmatpush1.msra.mxu0 0.0
    %740 = vmatprep.subr.mxu0 0.0
    %741 = vmatpush1.msra.mxu0 0.0
    %742 = vmatprep.subr.mxu0 0.0
    %743 = vmatpush1.msra.mxu0 0.0
    %744 = vmatprep.subr.mxu0 0.0
    %745 = vmatpush1.msra.mxu0 0.0
    %746 = vmatprep.subr.mxu0 0.0
    %747 = vmatpush1.msra.mxu0 0.0
    %748 = vmatprep.subr.mxu0 0.0
    %749 = vmatpush1.msra.mxu0 0.0
    %750 = vmatprep.mubr.f32.mxu0 0.0
    %751 = vmatmul.mubr.f32.gmra.mrb[0].mxu0 %v226
    %v752 = vpop.f32.mrb[0].mxu0
    %v753 = vadd.f32 %v152, %v752
    %v754 = vpop.f32.mrb[0].mxu0
    %v755 = vadd.f32 %v156, %v754
    %756 = vdwg.mxu0
    %757 = vmatprep.subr.mxu0 %v258
    %758 = vmatpush1.msra.mxu0 %v256
    %759 = vmatprep.subr.mxu0 0.0
    %760 = vmatpush1.msra.mxu0 0.0
    %761 = vmatprep.subr.mxu0 0.0
    %762 = vmatpush1.msra.mxu0 0.0
    %763 = vmatprep.subr.mxu0 0.0
    %764 = vmatpush1.msra.mxu0 0.0
    %765 = vmatprep.subr.mxu0 0.0
    %766 = vmatpush1.msra.mxu0 0.0
    %767 = vmatprep.subr.mxu0 0.0
    %768 = vmatpush1.msra.mxu0 0.0
    %769 = vmatprep.subr.mxu0 0.0
    %770 = vmatpush1.msra.mxu0 0.0
    %771 = vmatprep.subr.mxu0 0.0
    %772 = vmatpush1.msra.mxu0 0.0
    %773 = vmatprep.subr.mxu0 0.0
    %774 = vmatpush1.msra.mxu0 0.0
    %775 = vmatprep.subr.mxu0 0.0
    %776 = vmatpush1.msra.mxu0 0.0
    %777 = vmatprep.subr.mxu0 0.0
    %778 = vmatpush1.msra.mxu0 0.0
    %779 = vmatprep.subr.mxu0 0.0
    %780 = vmatpush1.msra.mxu0 0.0
    %781 = vmatprep.subr.mxu0 0.0
    %782 = vmatpush1.msra.mxu0 0.0
    %783 = vmatprep.subr.mxu0 0.0
    %784 = vmatpush1.msra.mxu0 0.0
    %785 = vmatprep.subr.mxu0 0.0
    %786 = vmatpush1.msra.mxu0 0.0
    %787 = vmatprep.subr.mxu0 0.0
    %788 = vmatpush1.msra.mxu0 0.0
    %789 = vmatprep.subr.mxu0 0.0
    %790 = vmatpush1.msra.mxu0 0.0
    %791 = vmatprep.subr.mxu0 0.0
    %792 = vmatpush1.msra.mxu0 0.0
    %793 = vmatprep.subr.mxu0 0.0
    %794 = vmatpush1.msra.mxu0 0.0
    %795 = vmatprep.subr.mxu0 0.0
    %796 = vmatpush1.msra.mxu0 0.0
    %797 = vmatprep.subr.mxu0 0.0
    %798 = vmatpush1.msra.mxu0 0.0
    %799 = vmatprep.subr.mxu0 0.0
    %800 = vmatpush1.msra.mxu0 0.0
    %801 = vmatprep.subr.mxu0 0.0
    %802 = vmatpush1.msra.mxu0 0.0
    %803 = vmatprep.subr.mxu0 0.0
    %804 = vmatpush1.msra.mxu0 0.0
    %805 = vmatprep.subr.mxu0 0.0
    %806 = vmatpush1.msra.mxu0 0.0
    %807 = vmatprep.subr.mxu0 0.0
    %808 = vmatpush1.msra.mxu0 0.0
    %809 = vmatprep.subr.mxu0 0.0
    %810 = vmatpush1.msra.mxu0 0.0
    %811 = vmatprep.subr.mxu0 0.0
    %812 = vmatpush1.msra.mxu0 0.0
    %813 = vmatprep.subr.mxu0 0.0
    %814 = vmatpush1.msra.mxu0 0.0
    %815 = vmatprep.subr.mxu0 0.0
    %816 = vmatpush1.msra.mxu0 0.0
    %817 = vmatprep.subr.mxu0 0.0
    %818 = vmatpush1.msra.mxu0 0.0
    %819 = vmatprep.subr.mxu0 0.0
    %820 = vmatpush1.msra.mxu0 0.0
    %821 = vmatprep.mubr.f32.mxu0 0.0
    %822 = vmatmul.mubr.f32.gmra.mrb[0].mxu0 %v226
    %v823 = vpop.f32.mrb[0].mxu0
    %v824 = vadd.f32 %v160, %v823
    %v825 = vpop.f32.mrb[0].mxu0
    %v826 = vadd.f32 %v164, %v825
    %827 = vdwg.mxu0
    %v828 = vmax.f32 %v327, 0.0
    %v829 = vmax.f32 %v329, 0.0
    %v830 = vmax.f32 %v398, 0.0
    %v831 = vmax.f32 %v400, 0.0
    %v832 = vmax.f32 %v469, 0.0
    %v833 = vmax.f32 %v471, 0.0
    %v834 = vmax.f32 %v540, 0.0
    %v835 = vmax.f32 %v542, 0.0
    %v836 = vmax.f32 %v611, 0.0
    %v837 = vmax.f32 %v613, 0.0
    %v838 = vmax.f32 %v682, 0.0
    %v839 = vmax.f32 %v684, 0.0
    %v840 = vmax.f32 %v753, 0.0
    %v841 = vmax.f32 %v755, 0.0
    %v842 = vmax.f32 %v824, 0.0
    %v843 = vmax.f32 %v826, 0.0
    %v860 = vcombine.low %v828, %v829
    %v861 = vcombine.low %v830, %v831
    %v862 = vcombine.low %v832, %v833
    %v863 = vcombine.low %v834, %v835
    %v864 = vcombine.low %v836, %v837
    %v865 = vcombine.low %v838, %v839
    %v866 = vcombine.low %v840, %v841
    %v867 = vcombine.low %v842, %v843
    %876 = vst [vmem:[#allocation8] sm:$0xff] %v860
    %877 = vst [vmem:[#allocation8 + $0x8] sm:$0xff] %v861
    %878 = vst [vmem:[#allocation8 + $0x10] sm:$0xff] %v862
    %879 = vst [vmem:[#allocation8 + $0x18] sm:$0xff] %v863
    %880 = vst [vmem:[#allocation8 + $0x20] sm:$0xff] %v864
    %881 = vst [vmem:[#allocation8 + $0x28] sm:$0xff] %v865
    %882 = vst [vmem:[#allocation8 + $0x30] sm:$0xff] %v866
    %883 = vst [vmem:[#allocation8 + $0x38] sm:$0xff] %v867
    // Predicated region
    $region26: #{tpu_custom_call.1} parent=1 // pred_check
      _
    $region27: #{tpu_custom_call.1} parent=1 // pred_check_branch
      %885 = sbr.rel (0) target = $region29
    $region28: #{tpu_custom_call.1} parent=1 // pred_region
      %s887 = ssub.s32 1024, 1024
      %888 = vsyncadd [#allocation4], %s887
      %s890 = sshll.u32 [#allocation8], 4
      %s891 = int_to_ptr.vmem [resolvable:$true] %s890
      %893 = dma.vmem_to_hbm [thread:$0]  %s891, 1024, %s3, [#allocation4]
    $region29: #{tpu_custom_call.1} parent=1 // pred_fallthru
      _
    // Predicated region
    $region30: #{tpu_custom_call.1} parent=1 // pred_check
      _
    $region31: #{tpu_custom_call.1} parent=1 // pred_check_branch
      %895 = sbr.rel (0) target = $region33
    $region32: #{tpu_custom_call.1} parent=1 // pred_region
      %896 = dma.done [#allocation4], 1024
    $region33: #{tpu_custom_call.1} parent=1 // pred_fallthru
      _
    %897 = vsyncpa [#allocation3], 1
    %898 = vsyncpa [#allocation6], 1
    %899 = vsyncpa [#allocation4], 1

</llo_original>
